<compile_context>
chip_gen: v7x
topology: tpu7x:2x2x1
jax: 0.10.0
libtpu: 0.0.40
codegen_flags: <defaults>
</compile_context>

<pallas_src>
import math

import jax
import jax.numpy as jnp
from jax import lax
from jax.experimental import pallas as pl
from jax.experimental.pallas import tpu as pltpu


# ---------------------------------------------------------------------------
# slope computation (parameter setup; plain Python, matches the PyTorch module)
# ---------------------------------------------------------------------------
def _get_slopes(heads: int) -> list[float]:
    def get_slopes_power_of_2(n):
        start = 2 ** (-(2 ** -(math.log2(n) - 3)))
        ratio = start
        return [start * ratio ** i for i in range(n)]

    if math.log2(heads).is_integer():
        return get_slopes_power_of_2(heads)
    closest_power_of_2 = 2 ** math.floor(math.log2(heads))
    return (
        get_slopes_power_of_2(closest_power_of_2)
        + get_slopes_power_of_2(2 * closest_power_of_2)[0::2][: heads - closest_power_of_2]
    )


def _pick_tile(dim: int, pref: int, align: int) -> int:
    """Pick a block size: aligned & bounded when possible, else full extent."""
    if dim % align == 0:
        return min(pref, dim)      # aligned block (cdiv grid handles the rest)
    if dim > pref:
        return pref                # aligned block + masked tail writes
    return dim                     # small / unaligned: single full-extent block


def _pick_head_tile(total_heads: int, cap: int = 8) -> int:
    """Largest divisor of total_heads that is <= cap (no head-tail masking needed)."""
    for d in range(min(cap, total_heads), 0, -1):
        if total_heads % d == 0:
            return d
    return 1


# ---------------------------------------------------------------------------
# Pallas kernel wrapper
# ---------------------------------------------------------------------------
def alibi_positional_bias(
    qlen: int,
    klen: int,
    heads: int,
    total_heads: int | None = None,
    *,
    tq_pref: int = 512,
    tk_pref: int = 1024,
    block_budget_bytes: int = 4 << 20,
    out_dtype=jnp.float32,
):
    """Returns bias of shape (total_heads, qlen, klen)."""
    total_heads = heads if total_heads is None else total_heads

    th = _pick_head_tile(total_heads, cap=8)            # heads per output block
    tk = _pick_tile(klen, tk_pref, 128)                 # lane-dense axis
    itemsize = jnp.dtype(out_dtype).itemsize
    tq_cap = max(8, (block_budget_bytes // (itemsize * th * tk)) // 8 * 8)
    tq = _pick_tile(qlen, min(tq_pref, tq_cap), 8)      # sublane axis

    h_tiles = total_heads // th
    q_tiles = pl.cdiv(qlen, tq)
    k_tiles = pl.cdiv(klen, tk)
    offset = klen - qlen                                # query i -> absolute pos offset + i

    # Pre-negated slopes (folds the '-' into the multiply); zero for un-alibied heads.
    neg_slopes = jnp.zeros((total_heads,), jnp.float32)
    neg_slopes = neg_slopes.at[:heads].set(-jnp.asarray(_get_slopes(heads), jnp.float32))

    def kernel(neg_slopes_ref, o_ref):
        # neg_slopes_ref: SMEM (total_heads,) f32   (scalar prefetch)
        # o_ref:          VMEM block (th, tq, tk)
        hi = pl.program_id(0)
        qi = pl.program_id(1)
        ki = pl.program_id(2)

        # Head-independent |key_pos - query_pos| tile, computed once per block
        # and reused for all th heads written this step.
        i = lax.broadcasted_iota(jnp.int32, (tq, tk), 0) + (qi * tq + offset)
        j = lax.broadcasted_iota(jnp.int32, (tq, tk), 1) + ki * tk
        rel = jnp.abs(j - i).astype(jnp.float32)

        for t in range(th):                              # static unroll (th <= 8)
            o_ref[t] = (rel * neg_slopes_ref[hi * th + t]).astype(o_ref.dtype)

    return pl.pallas_call(
        kernel,
        out_shape=jax.ShapeDtypeStruct((total_heads, qlen, klen), out_dtype),
        grid_spec=pltpu.PrefetchScalarGridSpec(
            num_scalar_prefetch=1,
            grid=(h_tiles, q_tiles, k_tiles),            # k innermost -> sequential HBM writes
            in_specs=[],
            out_specs=pl.BlockSpec(
                (th, tq, tk),
                lambda hi, qi, ki, slopes: (hi, qi, ki),
            ),
        ),
        compiler_params=pltpu.CompilerParams(
            dimension_semantics=("parallel", "parallel", "parallel"),
            vmem_limit_bytes=32 * 1024 * 1024,
        ),
    )(neg_slopes)


# ---------------------------------------------------------------------------
# pure-JAX reference (mirrors the PyTorch forward exactly)
# ---------------------------------------------------------------------------
def alibi_reference(qlen: int, klen: int, heads: int, total_heads: int):
    slopes = jnp.asarray(_get_slopes(heads), jnp.float32)[:, None, None]        # (h,1,1)
    seq_arange = jnp.arange(klen - qlen, klen)
    context_arange = jnp.arange(klen)
    bias = -jnp.abs(context_arange[None, None, :] - seq_arange[None, :, None])  # (1,i,j)
    bias = bias.astype(jnp.float32) * slopes                                    # (h,i,j)
    pad = total_heads - heads
    bias = jnp.pad(bias, ((0, pad), (0, 0), (0, 0)))
    return bias


if __name__ == "__main__":
    _ = jax.random.PRNGKey(0)  # determinism marker; kernel has no random inputs

    # 1) Small config consistent with the module (single-block path).
    heads, total_heads, qlen, klen = 4, 8, 8, 16
    out = jax.block_until_ready(alibi_positional_bias(qlen, klen, heads, total_heads))
    ref = alibi_reference(qlen, klen, heads, total_heads)
    assert out.shape == (total_heads, qlen, klen), out.shape
    assert out.dtype == jnp.float32
    assert jnp.allclose(out, ref, atol=1e-6, rtol=1e-6), float(jnp.max(jnp.abs(out - ref)))

    # 2) Tiled path: multiple q/k tiles, non-power-of-2 heads, zero-padded heads.
    heads2, total2, qlen2, klen2 = 3, 4, 256, 384
    out2 = jax.block_until_ready(
        alibi_positional_bias(qlen2, klen2, heads2, total2, tq_pref=128, tk_pref=128)
    )
    ref2 = alibi_reference(qlen2, klen2, heads2, total2)
    assert out2.shape == (total2, qlen2, klen2)
    assert jnp.allclose(out2, ref2, atol=1e-6, rtol=1e-6), float(jnp.max(jnp.abs(out2 - ref2)))

    # 3) Head-chunked grid: total_heads=12 -> th=6, two head blocks.
    heads3, total3, qlen3, klen3 = 12, 12, 64, 128
    out3 = jax.block_until_ready(alibi_positional_bias(qlen3, klen3, heads3, total3))
    ref3 = alibi_reference(qlen3, klen3, heads3, total3)
    assert out3.shape == (total3, qlen3, klen3)
    assert jnp.allclose(out3, ref3, atol=1e-6, rtol=1e-6), float(jnp.max(jnp.abs(out3 - ref3)))

    print("KERNEL_OK")
</pallas_src>

<mosaic_0001>
module attributes {stable_mosaic.version = 11 : i64} {
  func.func @kernel(%arg0: i32, %arg1: i32, %arg2: i32, %arg3: memref<8xf32, #tpu.memory_space<smem>>, %arg4: memref<8x8x16xf32, #tpu.memory_space<vmem>>) attributes {dimension_semantics = [#tpu.dimension_semantics<parallel>, #tpu.dimension_semantics<parallel>, #tpu.dimension_semantics<parallel>], iteration_bounds = array<i64: 1, 1, 1>, scalar_prefetch = 1 : i64, scratch_operands = 0 : i64, tpu.core_type = #tpu.core_type<tc>, window_params = [{transform_indices = @transform_0, window_bounds = array<i64: 8, 8, 16>}]} {
    %0 = tpu.iota {dimensions = array<i32: 0>} : vector<8x16xi32>
    %c8_i32 = arith.constant 8 : i32
    %1 = arith.muli %arg1, %c8_i32 : i32
    %c8_i32_0 = arith.constant 8 : i32
    %2 = arith.addi %1, %c8_i32_0 : i32
    %3 = vector.broadcast %2 : i32 to vector<8x16xi32>
    %4 = arith.addi %0, %3 : vector<8x16xi32>
    %5 = tpu.iota {dimensions = array<i32: 1>} : vector<8x16xi32>
    %c16_i32 = arith.constant 16 : i32
    %6 = arith.muli %arg2, %c16_i32 : i32
    %7 = vector.broadcast %6 : i32 to vector<8x16xi32>
    %8 = arith.addi %5, %7 : vector<8x16xi32>
    %9 = arith.subi %8, %4 : vector<8x16xi32>
    %10 = math.absi %9 : vector<8x16xi32>
    %11 = arith.sitofp %10 : vector<8x16xi32> to vector<8x16xf32>
    %c8_i32_1 = arith.constant 8 : i32
    %12 = arith.muli %arg0, %c8_i32_1 : i32
    %c0_i32 = arith.constant 0 : i32
    %13 = arith.addi %12, %c0_i32 : i32
    %14 = arith.index_cast %13 : i32 to index
    %15 = memref.load %arg3[%14] : memref<8xf32, #tpu.memory_space<smem>>
    %16 = vector.broadcast %15 : f32 to vector<8x16xf32>
    %17 = arith.mulf %11, %16 : vector<8x16xf32>
    %c0 = arith.constant 0 : index
    %c0_2 = arith.constant 0 : index
    %c0_3 = arith.constant 0 : index
    %18 = vector.load %arg4[%c0, %c0_2, %c0_3] : memref<8x8x16xf32, #tpu.memory_space<vmem>>, vector<1x8x16xf32>
    %19 = vector.shape_cast %18 : vector<1x8x16xf32> to vector<8x16xf32>
    %20 = vector.shape_cast %17 : vector<8x16xf32> to vector<1x8x16xf32>
    tpu.vector_store %arg4[%c0, %c0_2, %c0_3], %20 {strides = array<i32>} : memref<8x8x16xf32, #tpu.memory_space<vmem>>, vector<1x8x16xf32>,
    %c8_i32_4 = arith.constant 8 : i32
    %21 = arith.muli %arg0, %c8_i32_4 : i32
    %c1_i32 = arith.constant 1 : i32
    %22 = arith.addi %21, %c1_i32 : i32
    %23 = arith.index_cast %22 : i32 to index
    %24 = memref.load %arg3[%23] : memref<8xf32, #tpu.memory_space<smem>>
    %25 = vector.broadcast %24 : f32 to vector<8x16xf32>
    %26 = arith.mulf %11, %25 : vector<8x16xf32>
    %c1 = arith.constant 1 : index
    %c0_5 = arith.constant 0 : index
    %c0_6 = arith.constant 0 : index
    %27 = vector.load %arg4[%c1, %c0_5, %c0_6] : memref<8x8x16xf32, #tpu.memory_space<vmem>>, vector<1x8x16xf32>
    %28 = vector.shape_cast %27 : vector<1x8x16xf32> to vector<8x16xf32>
    %29 = vector.shape_cast %26 : vector<8x16xf32> to vector<1x8x16xf32>
    tpu.vector_store %arg4[%c1, %c0_5, %c0_6], %29 {strides = array<i32>} : memref<8x8x16xf32, #tpu.memory_space<vmem>>, vector<1x8x16xf32>,
    %c8_i32_7 = arith.constant 8 : i32
    %30 = arith.muli %arg0, %c8_i32_7 : i32
    %c2_i32 = arith.constant 2 : i32
    %31 = arith.addi %30, %c2_i32 : i32
    %32 = arith.index_cast %31 : i32 to index
    %33 = memref.load %arg3[%32] : memref<8xf32, #tpu.memory_space<smem>>
    %34 = vector.broadcast %33 : f32 to vector<8x16xf32>
    %35 = arith.mulf %11, %34 : vector<8x16xf32>
    %c2 = arith.constant 2 : index
    %c0_8 = arith.constant 0 : index
    %c0_9 = arith.constant 0 : index
    %36 = vector.load %arg4[%c2, %c0_8, %c0_9] : memref<8x8x16xf32, #tpu.memory_space<vmem>>, vector<1x8x16xf32>
    %37 = vector.shape_cast %36 : vector<1x8x16xf32> to vector<8x16xf32>
    %38 = vector.shape_cast %35 : vector<8x16xf32> to vector<1x8x16xf32>
    tpu.vector_store %arg4[%c2, %c0_8, %c0_9], %38 {strides = array<i32>} : memref<8x8x16xf32, #tpu.memory_space<vmem>>, vector<1x8x16xf32>,
    %c8_i32_10 = arith.constant 8 : i32
    %39 = arith.muli %arg0, %c8_i32_10 : i32
    %c3_i32 = arith.constant 3 : i32
    %40 = arith.addi %39, %c3_i32 : i32
    %41 = arith.index_cast %40 : i32 to index
    %42 = memref.load %arg3[%41] : memref<8xf32, #tpu.memory_space<smem>>
    %43 = vector.broadcast %42 : f32 to vector<8x16xf32>
    %44 = arith.mulf %11, %43 : vector<8x16xf32>
    %c3 = arith.constant 3 : index
    %c0_11 = arith.constant 0 : index
    %c0_12 = arith.constant 0 : index
    %45 = vector.load %arg4[%c3, %c0_11, %c0_12] : memref<8x8x16xf32, #tpu.memory_space<vmem>>, vector<1x8x16xf32>
    %46 = vector.shape_cast %45 : vector<1x8x16xf32> to vector<8x16xf32>
    %47 = vector.shape_cast %44 : vector<8x16xf32> to vector<1x8x16xf32>
    tpu.vector_store %arg4[%c3, %c0_11, %c0_12], %47 {strides = array<i32>} : memref<8x8x16xf32, #tpu.memory_space<vmem>>, vector<1x8x16xf32>,
    %c8_i32_13 = arith.constant 8 : i32
    %48 = arith.muli %arg0, %c8_i32_13 : i32
    %c4_i32 = arith.constant 4 : i32
    %49 = arith.addi %48, %c4_i32 : i32
    %50 = arith.index_cast %49 : i32 to index
    %51 = memref.load %arg3[%50] : memref<8xf32, #tpu.memory_space<smem>>
    %52 = vector.broadcast %51 : f32 to vector<8x16xf32>
    %53 = arith.mulf %11, %52 : vector<8x16xf32>
    %c4 = arith.constant 4 : index
    %c0_14 = arith.constant 0 : index
    %c0_15 = arith.constant 0 : index
    %54 = vector.load %arg4[%c4, %c0_14, %c0_15] : memref<8x8x16xf32, #tpu.memory_space<vmem>>, vector<1x8x16xf32>
    %55 = vector.shape_cast %54 : vector<1x8x16xf32> to vector<8x16xf32>
    %56 = vector.shape_cast %53 : vector<8x16xf32> to vector<1x8x16xf32>
    tpu.vector_store %arg4[%c4, %c0_14, %c0_15], %56 {strides = array<i32>} : memref<8x8x16xf32, #tpu.memory_space<vmem>>, vector<1x8x16xf32>,
    %c8_i32_16 = arith.constant 8 : i32
    %57 = arith.muli %arg0, %c8_i32_16 : i32
    %c5_i32 = arith.constant 5 : i32
    %58 = arith.addi %57, %c5_i32 : i32
    %59 = arith.index_cast %58 : i32 to index
    %60 = memref.load %arg3[%59] : memref<8xf32, #tpu.memory_space<smem>>
    %61 = vector.broadcast %60 : f32 to vector<8x16xf32>
    %62 = arith.mulf %11, %61 : vector<8x16xf32>
    %c5 = arith.constant 5 : index
    %c0_17 = arith.constant 0 : index
    %c0_18 = arith.constant 0 : index
    %63 = vector.load %arg4[%c5, %c0_17, %c0_18] : memref<8x8x16xf32, #tpu.memory_space<vmem>>, vector<1x8x16xf32>
    %64 = vector.shape_cast %63 : vector<1x8x16xf32> to vector<8x16xf32>
    %65 = vector.shape_cast %62 : vector<8x16xf32> to vector<1x8x16xf32>
    tpu.vector_store %arg4[%c5, %c0_17, %c0_18], %65 {strides = array<i32>} : memref<8x8x16xf32, #tpu.memory_space<vmem>>, vector<1x8x16xf32>,
    %c8_i32_19 = arith.constant 8 : i32
    %66 = arith.muli %arg0, %c8_i32_19 : i32
    %c6_i32 = arith.constant 6 : i32
    %67 = arith.addi %66, %c6_i32 : i32
    %68 = arith.index_cast %67 : i32 to index
    %69 = memref.load %arg3[%68] : memref<8xf32, #tpu.memory_space<smem>>
    %70 = vector.broadcast %69 : f32 to vector<8x16xf32>
    %71 = arith.mulf %11, %70 : vector<8x16xf32>
    %c6 = arith.constant 6 : index
    %c0_20 = arith.constant 0 : index
    %c0_21 = arith.constant 0 : index
    %72 = vector.load %arg4[%c6, %c0_20, %c0_21] : memref<8x8x16xf32, #tpu.memory_space<vmem>>, vector<1x8x16xf32>
    %73 = vector.shape_cast %72 : vector<1x8x16xf32> to vector<8x16xf32>
    %74 = vector.shape_cast %71 : vector<8x16xf32> to vector<1x8x16xf32>
    tpu.vector_store %arg4[%c6, %c0_20, %c0_21], %74 {strides = array<i32>} : memref<8x8x16xf32, #tpu.memory_space<vmem>>, vector<1x8x16xf32>,
    %c8_i32_22 = arith.constant 8 : i32
    %75 = arith.muli %arg0, %c8_i32_22 : i32
    %c7_i32 = arith.constant 7 : i32
    %76 = arith.addi %75, %c7_i32 : i32
    %77 = arith.index_cast %76 : i32 to index
    %78 = memref.load %arg3[%77] : memref<8xf32, #tpu.memory_space<smem>>
    %79 = vector.broadcast %78 : f32 to vector<8x16xf32>
    %80 = arith.mulf %11, %79 : vector<8x16xf32>
    %c7 = arith.constant 7 : index
    %c0_23 = arith.constant 0 : index
    %c0_24 = arith.constant 0 : index
    %81 = vector.load %arg4[%c7, %c0_23, %c0_24] : memref<8x8x16xf32, #tpu.memory_space<vmem>>, vector<1x8x16xf32>
    %82 = vector.shape_cast %81 : vector<1x8x16xf32> to vector<8x16xf32>
    %83 = vector.shape_cast %80 : vector<8x16xf32> to vector<1x8x16xf32>
    tpu.vector_store %arg4[%c7, %c0_23, %c0_24], %83 {strides = array<i32>} : memref<8x8x16xf32, #tpu.memory_space<vmem>>, vector<1x8x16xf32>,
    return
  }
  func.func @transform_0(%arg0: i32, %arg1: i32, %arg2: i32, %arg3: memref<8xf32, #tpu.memory_space<smem>>) -> (i32, i32, i32) {
    %c0_i32 = arith.constant 0 : i32
    return %arg0, %arg1, %arg2 : i32, i32, i32
  }
}

</mosaic_0001>

<llo_original>
// kernel: tpu_custom_call.1
$region0: #{tpu_custom_call.1}
  #allocation0 [shape = 'u32[]', space=smem, size = 0x4, offset = 0x4, fixed_abs, tag = 'smem constant byte address 0x4 - core index']
  #allocation1 [shape = 'u32[144,128]{1,0:T(1,128)}', space=vmem, size = 0x12000, scoped, tag = 'internal scratch']
  #allocation2 [shape = 's32[1]{0}', space=sflag, size = 0x4, scoped, tag = 'scoped memory for tpu_custom_call.1']
  #allocation3 [shape = 'u8[512]{0}', space=smem, size = 0x200, scoped, tag = 'prefetched SMEM operand 0']
  %s0 = inlined_call_operand.hbm [shape: f32[8], index: 0, kind: input, shape index: {}]
  %s1 = inlined_call_operand.hbm [shape: f32[8,8,16], index: 1, kind: output, shape index: {}]
  %s2 = sld [smem:[#allocation0]]
  $region10: #{tpu_custom_call.1} parent=0
    _
  %s4 = ssub.s32 1, %s2
  %s5 = scalar_select 0, %s4, %s2
  %7 = dma.hbm_to_smem %s0, 16, [#allocation3], [#allocation2]
  %8 = dma.done [#allocation2], 16
  %9 = sfence
  $region1: #{tpu_custom_call.1} parent=0
    #allocation4 [shape = 'u8[32768]{0}', space=vmem, size = 0x8000, scoped, tag = 'output window, operand 0, single buffered']
    #allocation5 [shape = 's32[1]{0}', space=sflag, size = 0x4, scoped, tag = 'scoped memory for tpu_custom_call.1']
    %10 = vsyncpa [#allocation5], 0
    %v11 = vlaneseq
    %v12 = vshrl.u32 %v11, 7
    %s13 = smul.u32 0, 8
    %s14 = sadd.s32 %s13, 8
    %v15 = vstv %s14
    %v16 = vadd.s32 %v12, %v15
    %v17 = vlaneseq
    %v18 = vand.u32 %v17, 127
    %s19 = smul.u32 0, 16
    %v20 = vstv %s19
    %v21 = vadd.s32 %v18, %v20
    %v22 = vsub.s32 %v21, %v16
    %vm23 = vcmp.lt.s32.totalorder %v22, 0
    %v24 = vsub.s32 0, %v22
    %v25 = vsel %vm23, %v24, %v22
    %v26 = vcvt.s32.f32 %v25
    %s27 = smul.u32 0, 8
    %s28 = sld [smem:[#allocation3 + %s27]]
    %v29 = vstv %s28
    %v30 = vmul.f32 %v26, %v29
    %vm31 = vcmask 130048
    %32 = vst.msk [vmem:[#allocation4] sm:$0xff] %vm31, %v30
    %s33 = sadd.s32 %s27, 1
    %s34 = sld [smem:[#allocation3 + %s33]]
    %v35 = vstv %s34
    %v36 = vmul.f32 %v26, %v35
    %s37 = scalar_lea.vmem [#allocation4], 8
    %38 = vst.msk [vmem:[%s37] sm:$0xff] %vm31, %v36
    %s39 = sadd.s32 %s27, 2
    %s40 = sld [smem:[#allocation3 + %s39]]
    %v41 = vstv %s40
    %v42 = vmul.f32 %v26, %v41
    %s43 = scalar_lea.vmem [#allocation4], 16
    %44 = vst.msk [vmem:[%s43] sm:$0xff] %vm31, %v42
    %s45 = sadd.s32 %s27, 3
    %s46 = sld [smem:[#allocation3 + %s45]]
    %v47 = vstv %s46
    %v48 = vmul.f32 %v26, %v47
    %s49 = scalar_lea.vmem [#allocation4], 24
    %50 = vst.msk [vmem:[%s49] sm:$0xff] %vm31, %v48
    %s51 = sadd.s32 %s27, 4
    %s52 = sld [smem:[#allocation3 + %s51]]
    %v53 = vstv %s52
    %v54 = vmul.f32 %v26, %v53
    %s55 = scalar_lea.vmem [#allocation4], 32
    %56 = vst.msk [vmem:[%s55] sm:$0xff] %vm31, %v54
    %s57 = sadd.s32 %s27, 5
    %s58 = sld [smem:[#allocation3 + %s57]]
    %v59 = vstv %s58
    %v60 = vmul.f32 %v26, %v59
    %s61 = scalar_lea.vmem [#allocation4], 40
    %62 = vst.msk [vmem:[%s61] sm:$0xff] %vm31, %v60
    %s63 = sadd.s32 %s27, 6
    %s64 = sld [smem:[#allocation3 + %s63]]
    %v65 = vstv %s64
    %v66 = vmul.f32 %v26, %v65
    %s67 = scalar_lea.vmem [#allocation4], 48
    %68 = vst.msk [vmem:[%s67] sm:$0xff] %vm31, %v66
    %s69 = sadd.s32 %s27, 7
    %s70 = sld [smem:[#allocation3 + %s69]]
    %v71 = vstv %s70
    %v72 = vmul.f32 %v26, %v71
    %s73 = scalar_lea.vmem [#allocation4], 56
    %74 = vst.msk [vmem:[%s73] sm:$0xff] %vm31, %v72
    // Predicated region
    $region2: #{tpu_custom_call.1} parent=1 // pred_check
      _
    $region3: #{tpu_custom_call.1} parent=1 // pred_check_branch
      %76 = sbr.rel (0) target = $region5
    $region4: #{tpu_custom_call.1} parent=1 // pred_region
      %s78 = ssub.s32 1024, 1024
      %79 = vsyncadd [#allocation5], %s78
      %s80 = sshll.u32 [#allocation4], 4
      %s81 = int_to_ptr.vmem [resolvable:$true] %s80
      %86 = dma.vmem_to_hbm [thread:$0]  %s81, 1024, %s1, [#allocation5], 128, 128, 8
    $region5: #{tpu_custom_call.1} parent=1 // pred_fallthru
      _
    // Predicated region
    $region6: #{tpu_custom_call.1} parent=1 // pred_check
      _
    $region7: #{tpu_custom_call.1} parent=1 // pred_check_branch
      %88 = sbr.rel (0) target = $region9
    $region8: #{tpu_custom_call.1} parent=1 // pred_region
      %89 = dma.done [#allocation5], 1024
    $region9: #{tpu_custom_call.1} parent=1 // pred_fallthru
      _
    %90 = vsyncpa [#allocation5], 1

</llo_original>
